<compile_context>
chip_gen: v6e
topology: v6e:2x2x1
jax: 0.10.0
libtpu: 0.0.40
codegen_flags: <defaults>
</compile_context>

<pallas_src>
import functools

import jax
import jax.numpy as jnp
from jax.experimental import pallas as pl
from jax.experimental.pallas import tpu as pltpu


def _inverted_residual_kernel(
    x_ref,       # (tile_n, 9*Cin)
    w_exp_ref,   # (9*Cin, 9*Cexp)  block-diagonal expander
    b_exp_ref,   # (1, 9*Cexp)
    w_mid_ref,   # (9*Cexp, Cexp)   flattened 3x3 taps
    b_mid_ref,   # (1, Cexp)
    w_red_ref,   # (Cexp, 9*Cout)   reducer, pre-tiled across 9 output pixels
    b_red_ref,   # (1, 9*Cout)
    w_sc_ref,    # (9*Cin, 9*Cout)  block-diagonal shortcut
    b_sc_ref,    # (1, 9*Cout)
    o_ref,       # (tile_n, 9*Cout)
    *,
    use_shortcut: bool,
):
    x = x_ref[...]                                            # (tile_n, 9*Cin)

    # expander: 1x1 conv over all 9 pixels at once (block-diag weight) + ReLU
    a = jnp.dot(x, w_exp_ref[...], preferred_element_type=jnp.float32)
    a = jnp.maximum(a + b_exp_ref[...], 0.0)                  # (tile_n, 9*Cexp)

    # middle: 3x3 VALID conv -> single output pixel, as one K = 9*Cexp matmul
    m = jnp.dot(a, w_mid_ref[...], preferred_element_type=jnp.float32)
    m = jnp.maximum(m + b_mid_ref[...], 0.0)                  # (tile_n, Cexp)

    # reducer: 1x1 conv + ReLU, weight pre-tiled across the 9 output pixels so
    # the residual broadcast is already folded in (ReLU commutes with tiling).
    r = jnp.dot(m, w_red_ref[...], preferred_element_type=jnp.float32)
    r = jnp.maximum(r + b_red_ref[...], 0.0)                  # (tile_n, 9*Cout)

    # shortcut: 1x1 conv (no activation) or identity (only when Cin == Cout)
    if use_shortcut:
        s = jnp.dot(x, w_sc_ref[...], preferred_element_type=jnp.float32)
        s = s + b_sc_ref[...]                                 # (tile_n, 9*Cout)
    else:
        s = x                                                 # Cin == Cout

    # residual add (PyTorch-style broadcast already baked into r's tiling)
    o_ref[...] = s + r


def _block_diag_tile(w2d, p):
    """(Ci, Co) -> (p*Ci, p*Co) block-diagonal with p identical blocks."""
    ci, co = w2d.shape
    eye = jnp.eye(p, dtype=w2d.dtype)
    bd = jnp.einsum("pq,io->piqo", eye, w2d)
    return bd.reshape(p * ci, p * co)


def inverted_residual_block(x_nchw, kparams, *, use_shortcut: bool,
                            tile_n_max: int = 256):
    """x_nchw: (N, Cin, 3, 3) float32 -> (N, Cout, 3, 3) float32."""
    N, Cin, H, W = x_nchw.shape
    assert H == 3 and W == 3, "PyTorch forward only type-checks for 3x3 spatial"
    P = H * W
    (w_exp_bd, b_exp_t, w_mid_flat, b_mid, w_red_t, b_red_t,
     w_sc_bd, b_sc_t) = kparams
    Cout = w_red_t.shape[1] // P
    if not use_shortcut:
        assert Cin == Cout, "identity residual requires Cin == Cout"

    # NCHW -> per-sample-row channels-last flat layout (N, 9*Cin)
    x_s = jnp.transpose(x_nchw, (0, 2, 3, 1)).reshape(N, P * Cin)

    # Row-block the batch. For N <= tile_n_max: one grid step (block == full
    # dims, no (8,128) divisibility concerns). Otherwise tile_n_max is a
    # multiple of 8 and we zero-pad N up to a multiple of it.
    tile_n = min(tile_n_max, N)
    n_blocks = pl.cdiv(N, tile_n)
    n_pad = n_blocks * tile_n
    if n_pad != N:
        x_s = jnp.pad(x_s, ((0, n_pad - N), (0, 0)))

    kernel = functools.partial(_inverted_residual_kernel,
                               use_shortcut=use_shortcut)

    def full_spec(arr):
        nd = arr.ndim
        return pl.BlockSpec(arr.shape, lambda i, _nd=nd: (0,) * _nd)

    out = pl.pallas_call(
        kernel,
        out_shape=jax.ShapeDtypeStruct((n_pad, P * Cout), jnp.float32),
        grid=(n_blocks,),
        in_specs=[
            pl.BlockSpec((tile_n, P * Cin), lambda i: (i, 0)),
            full_spec(w_exp_bd), full_spec(b_exp_t),
            full_spec(w_mid_flat), full_spec(b_mid),
            full_spec(w_red_t), full_spec(b_red_t),
            full_spec(w_sc_bd), full_spec(b_sc_t),
        ],
        out_specs=pl.BlockSpec((tile_n, P * Cout), lambda i: (i, 0)),
        compiler_params=pltpu.CompilerParams(
            dimension_semantics=("parallel",)),
    )(x_s, w_exp_bd, b_exp_t, w_mid_flat, b_mid, w_red_t, b_red_t,
      w_sc_bd, b_sc_t)

    # (N, 9*Cout) -> NCHW
    out = out[:N].reshape(N, H, W, Cout)
    return jnp.transpose(out, (0, 3, 1, 2))


def pack_params(we, be, wm, bm, wr, br, wsc, bsc, *, P=9):
    """Repack PyTorch-layout (OIHW / (O,)) weights into kernel layouts."""
    Cexp = we.shape[0]
    we_m = we[:, :, 0, 0].T                                   # (Cin, Cexp)
    wr_m = wr[:, :, 0, 0].T                                   # (Cexp, Cout)
    wsc_m = wsc[:, :, 0, 0].T                                 # (Cin, Cout)
    # (Cexp_out, Cexp_in, 3, 3) -> (kh, kw, ci, co) -> (9*Cexp, Cexp)
    w_mid_flat = jnp.transpose(wm, (2, 3, 1, 0)).reshape(P * Cexp, Cexp)
    return (
        _block_diag_tile(we_m, P),        # (9*Cin, 9*Cexp)
        jnp.tile(be, P)[None, :],         # (1, 9*Cexp)
        w_mid_flat,                       # (9*Cexp, Cexp)
        bm[None, :],                      # (1, Cexp)
        jnp.tile(wr_m, (1, P)),           # (Cexp, 9*Cout)
        jnp.tile(br, P)[None, :],         # (1, 9*Cout)
        _block_diag_tile(wsc_m, P),       # (9*Cin, 9*Cout)
        jnp.tile(bsc, P)[None, :],        # (1, 9*Cout)
    )


def ref_forward(x, torch_params, use_shortcut):
    """Pure-JAX reference matching the PyTorch module (OIHW weights, NCHW)."""
    we, be, wm, bm, wr, br, wsc, bsc = torch_params

    def conv(inp, w, b):
        y = jax.lax.conv_general_dilated(
            inp, w, (1, 1), "VALID",
            dimension_numbers=("NCHW", "OIHW", "NCHW"),
            precision=jax.lax.Precision.HIGHEST)
        return y + b[None, :, None, None]

    relu = lambda t: jnp.maximum(t, 0.0)
    h = relu(conv(x, we, be))
    h = relu(conv(h, wm, bm))
    h = relu(conv(h, wr, br))
    s = conv(x, wsc, bsc) if use_shortcut else x
    return s + h


if __name__ == "__main__":
    # in_channel=4, out_channel=8, expansion=2; spatial must be 3x3 (see note).
    N, Cin, H, W = 2, 4, 3, 3
    Cout, expansion = 8, 2
    Cexp = Cin * expansion
    use_shortcut = (Cout != Cin)   # module adds shortcut conv only if out != in

    key = jax.random.PRNGKey(0)
    keys = jax.random.split(key, 9)
    scale = 0.1
    # Deterministic synthetic parameters in PyTorch layout (OIHW / (O,)).
    we = jax.random.normal(keys[0], (Cexp, Cin, 1, 1), jnp.float32) * scale
    be = jax.random.normal(keys[1], (Cexp,), jnp.float32) * scale
    wm = jax.random.normal(keys[2], (Cexp, Cexp, 3, 3), jnp.float32) * scale
    bm = jax.random.normal(keys[3], (Cexp,), jnp.float32) * scale
    wr = jax.random.normal(keys[4], (Cout, Cexp, 1, 1), jnp.float32) * scale
    br = jax.random.normal(keys[5], (Cout,), jnp.float32) * scale
    wsc = jax.random.normal(keys[6], (Cout, Cin, 1, 1), jnp.float32) * scale
    bsc = jax.random.normal(keys[7], (Cout,), jnp.float32) * scale
    x = jax.random.normal(keys[8], (N, Cin, H, W), jnp.float32)

    kernel_params = pack_params(we, be, wm, bm, wr, br, wsc, bsc, P=H * W)

    y = inverted_residual_block(x, kernel_params, use_shortcut=use_shortcut)
    y = jax.block_until_ready(y)

    y_ref = ref_forward(x, (we, be, wm, bm, wr, br, wsc, bsc), use_shortcut)
    assert y.shape == y_ref.shape == (N, Cout, H, W)
    assert jnp.allclose(y, y_ref, atol=1e-2, rtol=1e-2), \
        float(jnp.max(jnp.abs(y - y_ref)))
    print("KERNEL_OK")
</pallas_src>

<mosaic_0001>
module attributes {stable_mosaic.version = 11 : i64} {
  func.func @_inverted_residual_kernel(%arg0: i32, %arg1: memref<2x36xf32, #tpu.memory_space<vmem>>, %arg2: memref<36x72xf32, #tpu.memory_space<vmem>>, %arg3: memref<1x72xf32, #tpu.memory_space<vmem>>, %arg4: memref<72x8xf32, #tpu.memory_space<vmem>>, %arg5: memref<1x8xf32, #tpu.memory_space<vmem>>, %arg6: memref<8x72xf32, #tpu.memory_space<vmem>>, %arg7: memref<1x72xf32, #tpu.memory_space<vmem>>, %arg8: memref<36x72xf32, #tpu.memory_space<vmem>>, %arg9: memref<1x72xf32, #tpu.memory_space<vmem>>, %arg10: memref<2x72xf32, #tpu.memory_space<vmem>>) attributes {dimension_semantics = [#tpu.dimension_semantics<parallel>], iteration_bounds = array<i64: 1>, scalar_prefetch = 0 : i64, scratch_operands = 0 : i64, tpu.core_type = #tpu.core_type<tc>, window_params = [{transform_indices = @transform_0, window_bounds = array<i64: 2, 36>}, {pipeline_mode = #tpu.pipeline_mode<synchronous>, transform_indices = @transform_1, window_bounds = array<i64: 36, 72>}, {pipeline_mode = #tpu.pipeline_mode<synchronous>, transform_indices = @transform_2, window_bounds = array<i64: 1, 72>}, {pipeline_mode = #tpu.pipeline_mode<synchronous>, transform_indices = @transform_3, window_bounds = array<i64: 72, 8>}, {pipeline_mode = #tpu.pipeline_mode<synchronous>, transform_indices = @transform_4, window_bounds = array<i64: 1, 8>}, {pipeline_mode = #tpu.pipeline_mode<synchronous>, transform_indices = @transform_5, window_bounds = array<i64: 8, 72>}, {pipeline_mode = #tpu.pipeline_mode<synchronous>, transform_indices = @transform_6, window_bounds = array<i64: 1, 72>}, {pipeline_mode = #tpu.pipeline_mode<synchronous>, transform_indices = @transform_7, window_bounds = array<i64: 36, 72>}, {pipeline_mode = #tpu.pipeline_mode<synchronous>, transform_indices = @transform_8, window_bounds = array<i64: 1, 72>}, {transform_indices = @transform_9, window_bounds = array<i64: 2, 72>}]} {
    %c0 = arith.constant 0 : index
    %c0_0 = arith.constant 0 : index
    %0 = vector.load %arg1[%c0, %c0_0] : memref<2x36xf32, #tpu.memory_space<vmem>>, vector<2x36xf32>
    %c0_1 = arith.constant 0 : index
    %c0_2 = arith.constant 0 : index
    %1 = vector.load %arg2[%c0_1, %c0_2] : memref<36x72xf32, #tpu.memory_space<vmem>>, vector<36x72xf32>
    %cst = arith.constant dense<0.000000e+00> : vector<2x72xf32>
    %2 = tpu.matmul %0, %1, %cst {dimension_numbers = #tpu.dot_dimension_numbers<[1], [0], [0], [1], [0, 0, 1, 1], [], []>} : vector<2x36xf32>, vector<36x72xf32>, vector<2x72xf32> -> vector<2x72xf32>
    %c0_3 = arith.constant 0 : index
    %c0_4 = arith.constant 0 : index
    %3 = vector.load %arg3[%c0_3, %c0_4] : memref<1x72xf32, #tpu.memory_space<vmem>>, vector<1x72xf32>
    %4 = vector.broadcast %3 : vector<1x72xf32> to vector<2x72xf32>
    %5 = arith.addf %2, %4 : vector<2x72xf32>
    %cst_5 = arith.constant 0.000000e+00 : f32
    %6 = vector.broadcast %cst_5 : f32 to vector<2x72xf32>
    %7 = arith.maximumf %5, %6 : vector<2x72xf32>
    %c0_6 = arith.constant 0 : index
    %c0_7 = arith.constant 0 : index
    %8 = vector.load %arg4[%c0_6, %c0_7] : memref<72x8xf32, #tpu.memory_space<vmem>>, vector<72x8xf32>
    %cst_8 = arith.constant dense<0.000000e+00> : vector<2x8xf32>
    %9 = tpu.matmul %7, %8, %cst_8 {dimension_numbers = #tpu.dot_dimension_numbers<[1], [0], [0], [1], [0, 0, 1, 1], [], []>} : vector<2x72xf32>, vector<72x8xf32>, vector<2x8xf32> -> vector<2x8xf32>
    %c0_9 = arith.constant 0 : index
    %c0_10 = arith.constant 0 : index
    %10 = vector.load %arg5[%c0_9, %c0_10] : memref<1x8xf32, #tpu.memory_space<vmem>>, vector<1x8xf32>
    %11 = vector.broadcast %10 : vector<1x8xf32> to vector<2x8xf32>
    %12 = arith.addf %9, %11 : vector<2x8xf32>
    %cst_11 = arith.constant 0.000000e+00 : f32
    %13 = vector.broadcast %cst_11 : f32 to vector<2x8xf32>
    %14 = arith.maximumf %12, %13 : vector<2x8xf32>
    %c0_12 = arith.constant 0 : index
    %c0_13 = arith.constant 0 : index
    %15 = vector.load %arg6[%c0_12, %c0_13] : memref<8x72xf32, #tpu.memory_space<vmem>>, vector<8x72xf32>
    %cst_14 = arith.constant dense<0.000000e+00> : vector<2x72xf32>
    %16 = tpu.matmul %14, %15, %cst_14 {dimension_numbers = #tpu.dot_dimension_numbers<[1], [0], [0], [1], [0, 0, 1, 1], [], []>} : vector<2x8xf32>, vector<8x72xf32>, vector<2x72xf32> -> vector<2x72xf32>
    %c0_15 = arith.constant 0 : index
    %c0_16 = arith.constant 0 : index
    %17 = vector.load %arg7[%c0_15, %c0_16] : memref<1x72xf32, #tpu.memory_space<vmem>>, vector<1x72xf32>
    %18 = vector.broadcast %17 : vector<1x72xf32> to vector<2x72xf32>
    %19 = arith.addf %16, %18 : vector<2x72xf32>
    %cst_17 = arith.constant 0.000000e+00 : f32
    %20 = vector.broadcast %cst_17 : f32 to vector<2x72xf32>
    %21 = arith.maximumf %19, %20 : vector<2x72xf32>
    %c0_18 = arith.constant 0 : index
    %c0_19 = arith.constant 0 : index
    %22 = vector.load %arg8[%c0_18, %c0_19] : memref<36x72xf32, #tpu.memory_space<vmem>>, vector<36x72xf32>
    %cst_20 = arith.constant dense<0.000000e+00> : vector<2x72xf32>
    %23 = tpu.matmul %0, %22, %cst_20 {dimension_numbers = #tpu.dot_dimension_numbers<[1], [0], [0], [1], [0, 0, 1, 1], [], []>} : vector<2x36xf32>, vector<36x72xf32>, vector<2x72xf32> -> vector<2x72xf32>
    %c0_21 = arith.constant 0 : index
    %c0_22 = arith.constant 0 : index
    %24 = vector.load %arg9[%c0_21, %c0_22] : memref<1x72xf32, #tpu.memory_space<vmem>>, vector<1x72xf32>
    %25 = vector.broadcast %24 : vector<1x72xf32> to vector<2x72xf32>
    %26 = arith.addf %23, %25 : vector<2x72xf32>
    %27 = arith.addf %26, %21 : vector<2x72xf32>
    %c0_23 = arith.constant 0 : index
    %c0_24 = arith.constant 0 : index
    %28 = vector.load %arg10[%c0_23, %c0_24] : memref<2x72xf32, #tpu.memory_space<vmem>>, vector<2x72xf32>
    tpu.vector_store %arg10[%c0_23, %c0_24], %27 {strides = array<i32>} : memref<2x72xf32, #tpu.memory_space<vmem>>, vector<2x72xf32>,
    return
  }
  func.func @transform_0(%arg0: i32) -> (i32, i32) {
    %c0_i32 = arith.constant 0 : i32
    %c0_i32_0 = arith.constant 0 : i32
    return %arg0, %c0_i32 : i32, i32
  }
  func.func @transform_1(%arg0: i32) -> (i32, i32) {
    %c0_i32 = arith.constant 0 : i32
    %c0_i32_0 = arith.constant 0 : i32
    %c0_i32_1 = arith.constant 0 : i32
    return %c0_i32, %c0_i32_0 : i32, i32
  }
  func.func @transform_2(%arg0: i32) -> (i32, i32) {
    %c0_i32 = arith.constant 0 : i32
    %c0_i32_0 = arith.constant 0 : i32
    %c0_i32_1 = arith.constant 0 : i32
    return %c0_i32, %c0_i32_0 : i32, i32
  }
  func.func @transform_3(%arg0: i32) -> (i32, i32) {
    %c0_i32 = arith.constant 0 : i32
    %c0_i32_0 = arith.constant 0 : i32
    %c0_i32_1 = arith.constant 0 : i32
    return %c0_i32, %c0_i32_0 : i32, i32
  }
  func.func @transform_4(%arg0: i32) -> (i32, i32) {
    %c0_i32 = arith.constant 0 : i32
    %c0_i32_0 = arith.constant 0 : i32
    %c0_i32_1 = arith.constant 0 : i32
    return %c0_i32, %c0_i32_0 : i32, i32
  }
  func.func @transform_5(%arg0: i32) -> (i32, i32) {
    %c0_i32 = arith.constant 0 : i32
    %c0_i32_0 = arith.constant 0 : i32
    %c0_i32_1 = arith.constant 0 : i32
    return %c0_i32, %c0_i32_0 : i32, i32
  }
  func.func @transform_6(%arg0: i32) -> (i32, i32) {
    %c0_i32 = arith.constant 0 : i32
    %c0_i32_0 = arith.constant 0 : i32
    %c0_i32_1 = arith.constant 0 : i32
    return %c0_i32, %c0_i32_0 : i32, i32
  }
  func.func @transform_7(%arg0: i32) -> (i32, i32) {
    %c0_i32 = arith.constant 0 : i32
    %c0_i32_0 = arith.constant 0 : i32
    %c0_i32_1 = arith.constant 0 : i32
    return %c0_i32, %c0_i32_0 : i32, i32
  }
  func.func @transform_8(%arg0: i32) -> (i32, i32) {
    %c0_i32 = arith.constant 0 : i32
    %c0_i32_0 = arith.constant 0 : i32
    %c0_i32_1 = arith.constant 0 : i32
    return %c0_i32, %c0_i32_0 : i32, i32
  }
  func.func @transform_9(%arg0: i32) -> (i32, i32) {
    %c0_i32 = arith.constant 0 : i32
    %c0_i32_0 = arith.constant 0 : i32
    return %arg0, %c0_i32 : i32, i32
  }
}

</mosaic_0001>

<llo_original>
// kernel: tpu_custom_call.1
$region0: #{tpu_custom_call.1}
  #allocation0 [shape = 'u32[]', space=smem, size = 0x4, offset = 0x4, fixed_abs, tag = 'smem constant byte address 0x4 - core index']
  #allocation1 [shape = 'u32[144,128]{1,0:T(1,128)}', space=vmem, size = 0x12000, scoped, tag = 'internal scratch']
  %s0 = inlined_call_operand.hbm [shape: f32[2,36], index: 0, kind: input, shape index: {}]
  %s1 = inlined_call_operand.vmem [shape: f32[36,72], index: 1, kind: input, shape index: {}]
  %s2 = inlined_call_operand.vmem [shape: f32[1,72], index: 2, kind: input, shape index: {}]
  %s3 = inlined_call_operand.vmem [shape: f32[72,8], index: 3, kind: input, shape index: {}]
  %s4 = inlined_call_operand.hbm [shape: f32[1,8], index: 4, kind: input, shape index: {}]
  %s5 = inlined_call_operand.vmem [shape: f32[8,72], index: 5, kind: input, shape index: {}]
  %s6 = inlined_call_operand.vmem [shape: f32[1,72], index: 6, kind: input, shape index: {}]
  %s7 = inlined_call_operand.vmem [shape: f32[36,72], index: 7, kind: input, shape index: {}]
  %s8 = inlined_call_operand.vmem [shape: f32[1,72], index: 8, kind: input, shape index: {}]
  %s9 = inlined_call_operand.hbm [shape: f32[2,72], index: 9, kind: output, shape index: {}]
  %s10 = sld [smem:[#allocation0]]
  $region54: #{tpu_custom_call.1} parent=0
    _
  %s12 = ssub.s32 1, %s10
  %s13 = scalar_select 0, %s12, %s10
  $region1: #{tpu_custom_call.1} parent=0
    #allocation2 [shape = 'u8[1024]{0}', space=vmem, size = 0x400, scoped, tag = 'input window, operand 0, single buffered']
    #allocation3 [shape = 's32[1]{0}', space=sflag, size = 0x4, scoped, tag = 'scoped memory for tpu_custom_call.1']
    #allocation4 [shape = 's32[1]{0}', space=sflag, size = 0x4, scoped, tag = 'scoped memory for tpu_custom_call.1']
    #allocation5 [shape = 'u8[512]{0}', space=vmem, size = 0x400, scoped, tag = 'input window, operand 4, single buffered']
    #allocation6 [shape = 's32[1]{0}', space=sflag, size = 0x4, scoped, tag = 'scoped memory for tpu_custom_call.1']
    #allocation7 [shape = 'u8[1024]{0}', space=vmem, size = 0x400, scoped, tag = 'output window, operand 0, single buffered']
    %14 = vsyncpa [#allocation3], 0
    %15 = vsyncpa [#allocation6], 0
    %16 = vsyncpa [#allocation4], 0
    // Predicated region
    $region2: #{tpu_custom_call.1} parent=1 // pred_check
      _
    $region3: #{tpu_custom_call.1} parent=1 // pred_check_branch
      %18 = sbr.rel (0) target = $region5
    $region4: #{tpu_custom_call.1} parent=1 // pred_region
      %s20 = ssub.s32 32, 32
      %21 = vsyncadd [#allocation3], %s20
      %s23 = sshll.u32 [#allocation2], 4
      %s24 = int_to_ptr.vmem [resolvable:$true] %s23
      %26 = dma.hbm_to_vmem [thread:$0]  %s0, 32, %s24, [#allocation3]
    $region5: #{tpu_custom_call.1} parent=1 // pred_fallthru
      _
    // Predicated region
    $region6: #{tpu_custom_call.1} parent=1 // pred_check
      _
    $region7: #{tpu_custom_call.1} parent=1 // pred_check_branch
      %28 = sbr.rel (0) target = $region9
    $region8: #{tpu_custom_call.1} parent=1 // pred_region
      _
    $region9: #{tpu_custom_call.1} parent=1 // pred_fallthru
      _
    // Predicated region
    $region10: #{tpu_custom_call.1} parent=1 // pred_check
      _
    $region11: #{tpu_custom_call.1} parent=1 // pred_check_branch
      %30 = sbr.rel (0) target = $region13
    $region12: #{tpu_custom_call.1} parent=1 // pred_region
      _
    $region13: #{tpu_custom_call.1} parent=1 // pred_fallthru
      _
    // Predicated region
    $region14: #{tpu_custom_call.1} parent=1 // pred_check
      _
    $region15: #{tpu_custom_call.1} parent=1 // pred_check_branch
      %32 = sbr.rel (0) target = $region17
    $region16: #{tpu_custom_call.1} parent=1 // pred_region
      _
    $region17: #{tpu_custom_call.1} parent=1 // pred_fallthru
      _
    // Predicated region
    $region18: #{tpu_custom_call.1} parent=1 // pred_check
      _
    $region19: #{tpu_custom_call.1} parent=1 // pred_check_branch
      %34 = sbr.rel (0) target = $region21
    $region20: #{tpu_custom_call.1} parent=1 // pred_region
      %s36 = ssub.s32 16, 16
      %37 = vsyncadd [#allocation6], %s36
      %s39 = sshll.u32 [#allocation5], 4
      %s40 = int_to_ptr.vmem [resolvable:$true] %s39
      %42 = dma.hbm_to_vmem [thread:$0]  %s4, 16, %s40, [#allocation6]
    $region21: #{tpu_custom_call.1} parent=1 // pred_fallthru
      _
    // Predicated region
    $region22: #{tpu_custom_call.1} parent=1 // pred_check
      _
    $region23: #{tpu_custom_call.1} parent=1 // pred_check_branch
      %44 = sbr.rel (0) target = $region25
    $region24: #{tpu_custom_call.1} parent=1 // pred_region
      _
    $region25: #{tpu_custom_call.1} parent=1 // pred_fallthru
      _
    // Predicated region
    $region26: #{tpu_custom_call.1} parent=1 // pred_check
      _
    $region27: #{tpu_custom_call.1} parent=1 // pred_check_branch
      %46 = sbr.rel (0) target = $region29
    $region28: #{tpu_custom_call.1} parent=1 // pred_region
      _
    $region29: #{tpu_custom_call.1} parent=1 // pred_fallthru
      _
    // Predicated region
    $region30: #{tpu_custom_call.1} parent=1 // pred_check
      _
    $region31: #{tpu_custom_call.1} parent=1 // pred_check_branch
      %48 = sbr.rel (0) target = $region33
    $region32: #{tpu_custom_call.1} parent=1 // pred_region
      _
    $region33: #{tpu_custom_call.1} parent=1 // pred_fallthru
      _
    // Predicated region
    $region34: #{tpu_custom_call.1} parent=1 // pred_check
      _
    $region35: #{tpu_custom_call.1} parent=1 // pred_check_branch
      %50 = sbr.rel (0) target = $region37
    $region36: #{tpu_custom_call.1} parent=1 // pred_region
      _
    $region37: #{tpu_custom_call.1} parent=1 // pred_fallthru
      _
    // Predicated region
    $region38: #{tpu_custom_call.1} parent=1 // pred_check
      _
    $region39: #{tpu_custom_call.1} parent=1 // pred_check_branch
      %52 = sbr.rel (0) target = $region41
    $region40: #{tpu_custom_call.1} parent=1 // pred_region
      %53 = dma.done [#allocation3], 32
    $region41: #{tpu_custom_call.1} parent=1 // pred_fallthru
      _
    // Predicated region
    $region42: #{tpu_custom_call.1} parent=1 // pred_check
      _
    $region43: #{tpu_custom_call.1} parent=1 // pred_check_branch
      %55 = sbr.rel (0) target = $region45
    $region44: #{tpu_custom_call.1} parent=1 // pred_region
      %56 = dma.done [#allocation6], 16
    $region45: #{tpu_custom_call.1} parent=1 // pred_fallthru
      _
    %v57 = vld [vmem:[#allocation2] sm:$0x3]
    %v58 = vld [vmem:[%s1] sm:$0xff]
    %v59 = vld [vmem:[%s1 + $0x8] sm:$0xff]
    %v60 = vld [vmem:[%s1 + $0x10] sm:$0xff]
    %v61 = vld [vmem:[%s1 + $0x18] sm:$0xff]
    %v62 = vld [vmem:[%s1 + $0x20] sm:$0xf]
    %v63 = vld [vmem:[%s2] sm:$0x1]
    %v65 = vlaneseq
    %v66 = vshrl.u32 %v65, 7
    %v67 = vsub.s32 0, %v66
    %v68 = vrot.slane %v63, %v67
    %vm70 = vcmask 293888
    %v72 = vsel %vm70, %v57, 0
    %vm74 = vcmask 1043456
    %v76 = vsel %vm74, %v62, 0
    %78 = vmatprep.subr.mxu0 0.0
    %79 = vmatpush1.msra.mxu0 0.0
    %80 = vmatprep.subr.mxu0 0.0
    %81 = vmatpush1.msra.mxu0 0.0
    %82 = vmatprep.subr.mxu0 0.0
    %83 = vmatpush1.msra.mxu0 0.0
    %84 = vmatprep.subr.mxu0 0.0
    %85 = vmatpush1.msra.mxu0 0.0
    %86 = vmatprep.subr.mxu0 0.0
    %87 = vmatpush1.msra.mxu0 0.0
    %88 = vmatprep.subr.mxu0 0.0
    %89 = vmatpush1.msra.mxu0 0.0
    %90 = vmatprep.subr.mxu0 0.0
    %91 = vmatpush1.msra.mxu0 0.0
    %92 = vmatprep.subr.mxu0 0.0
    %93 = vmatpush1.msra.mxu0 0.0
    %94 = vmatprep.subr.mxu0 0.0
    %95 = vmatpush1.msra.mxu0 0.0
    %96 = vmatprep.subr.mxu0 0.0
    %97 = vmatpush1.msra.mxu0 0.0
    %98 = vmatprep.subr.mxu0 0.0
    %99 = vmatpush1.msra.mxu0 0.0
    %100 = vmatprep.subr.mxu0 0.0
    %101 = vmatpush1.msra.mxu0 %v76
    %102 = vmatprep.subr.mxu0 0.0
    %103 = vmatpush1.msra.mxu0 %v61
    %104 = vmatprep.subr.mxu0 0.0
    %105 = vmatpush1.msra.mxu0 %v60
    %106 = vmatprep.subr.mxu0 0.0
    %107 = vmatpush1.msra.mxu0 %v59
    %108 = vmatprep.subr.mxu0 0.0
    %109 = vmatpush1.msra.mxu0 %v58
    %110 = vmatprep.subr.mxu0 0.0
    %111 = vmatpush2.msra.mxu0 0.0
    %112 = vmatprep.subr.mxu0 0.0
    %113 = vmatpush2.msra.mxu0 0.0
    %114 = vmatprep.subr.mxu0 0.0
    %115 = vmatpush2.msra.mxu0 0.0
    %116 = vmatprep.subr.mxu0 0.0
    %117 = vmatpush2.msra.mxu0 0.0
    %118 = vmatprep.subr.mxu0 0.0
    %119 = vmatpush2.msra.mxu0 0.0
    %120 = vmatprep.subr.mxu0 0.0
    %121 = vmatpush2.msra.mxu0 0.0
    %122 = vmatprep.subr.mxu0 0.0
    %123 = vmatpush2.msra.mxu0 0.0
    %124 = vmatprep.subr.mxu0 0.0
    %125 = vmatpush2.msra.mxu0 0.0
    %126 = vmatprep.subr.mxu0 0.0
    %127 = vmatpush2.msra.mxu0 0.0
    %128 = vmatprep.subr.mxu0 0.0
    %129 = vmatpush2.msra.mxu0 0.0
    %130 = vmatprep.subr.mxu0 0.0
    %131 = vmatpush2.msra.mxu0 0.0
    %132 = vmatprep.subr.mxu0 0.0
    %133 = vmatpush2.msra.mxu0 0.0
    %134 = vmatprep.subr.mxu0 0.0
    %135 = vmatpush2.msra.mxu0 0.0
    %136 = vmatprep.subr.mxu0 0.0
    %137 = vmatpush2.msra.mxu0 0.0
    %138 = vmatprep.subr.mxu0 0.0
    %139 = vmatpush2.msra.mxu0 0.0
    %140 = vmatprep.subr.mxu0 0.0
    %141 = vmatpush2.msra.mxu0 0.0
    %142 = vmatprep.mubr.f32.mxu0 0.0
    %143 = vmatmul.mubr.f32.gmra.mxu0 %v72
    %v144 = vpop.f32.mrf.mxu0
    %v145 = vadd.f32 %v68, %v144
    %v146 = vpop.f32.mrf.mxu0
    %147 = vdwg.mxu0
    %v148 = vmax.f32 %v145, 0.0
    %v149 = vld [vmem:[%s3] sm:$0xff]
    %v150 = vld [vmem:[%s3 + $0x8] sm:$0xff]
    %v151 = vld [vmem:[%s3 + $0x10] sm:$0xff]
    %v152 = vld [vmem:[%s3 + $0x18] sm:$0xff]
    %v153 = vld [vmem:[%s3 + $0x20] sm:$0xff]
    %v154 = vld [vmem:[%s3 + $0x28] sm:$0xff]
    %v155 = vld [vmem:[%s3 + $0x30] sm:$0xff]
    %v156 = vld [vmem:[%s3 + $0x38] sm:$0xff]
    %v157 = vld [vmem:[%s3 + $0x40] sm:$0xff]
    %v158 = vld [vmem:[#allocation5] sm:$0x1]
    %v160 = vlaneseq
    %v161 = vshrl.u32 %v160, 7
    %v162 = vsub.s32 0, %v161
    %v163 = vrot.slane %v158, %v162
    %vm165 = vcmask 588800
    %v167 = vsel %vm165, %v148, 0
    %169 = vmatprep.subr.mxu0 0.0
    %170 = vmatpush1.msra.mxu0 0.0
    %171 = vmatprep.subr.mxu0 0.0
    %172 = vmatpush1.msra.mxu0 0.0
    %173 = vmatprep.subr.mxu0 0.0
    %174 = vmatpush1.msra.mxu0 0.0
    %175 = vmatprep.subr.mxu0 0.0
    %176 = vmatpush1.msra.mxu0 0.0
    %177 = vmatprep.subr.mxu0 0.0
    %178 = vmatpush1.msra.mxu0 0.0
    %179 = vmatprep.subr.mxu0 0.0
    %180 = vmatpush1.msra.mxu0 0.0
    %181 = vmatprep.subr.mxu0 0.0
    %182 = vmatpush1.msra.mxu0 0.0
    %183 = vmatprep.subr.mxu0 0.0
    %184 = vmatpush1.msra.mxu0 %v157
    %185 = vmatprep.subr.mxu0 0.0
    %186 = vmatpush1.msra.mxu0 %v156
    %187 = vmatprep.subr.mxu0 0.0
    %188 = vmatpush1.msra.mxu0 %v155
    %189 = vmatprep.subr.mxu0 0.0
    %190 = vmatpush1.msra.mxu0 %v154
    %191 = vmatprep.subr.mxu0 0.0
    %192 = vmatpush1.msra.mxu0 %v153
    %193 = vmatprep.subr.mxu0 0.0
    %194 = vmatpush1.msra.mxu0 %v152
    %195 = vmatprep.subr.mxu0 0.0
    %196 = vmatpush1.msra.mxu0 %v151
    %197 = vmatprep.subr.mxu0 0.0
    %198 = vmatpush1.msra.mxu0 %v150
    %199 = vmatprep.subr.mxu0 0.0
    %200 = vmatpush1.msra.mxu0 %v149
    %201 = vmatprep.subr.mxu0 0.0
    %202 = vmatpush2.msra.mxu0 0.0
    %203 = vmatprep.subr.mxu0 0.0
    %204 = vmatpush2.msra.mxu0 0.0
    %205 = vmatprep.subr.mxu0 0.0
    %206 = vmatpush2.msra.mxu0 0.0
    %207 = vmatprep.subr.mxu0 0.0
    %208 = vmatpush2.msra.mxu0 0.0
    %209 = vmatprep.subr.mxu0 0.0
    %210 = vmatpush2.msra.mxu0 0.0
    %211 = vmatprep.subr.mxu0 0.0
    %212 = vmatpush2.msra.mxu0 0.0
    %213 = vmatprep.subr.mxu0 0.0
    %214 = vmatpush2.msra.mxu0 0.0
    %215 = vmatprep.subr.mxu0 0.0
    %216 = vmatpush2.msra.mxu0 0.0
    %217 = vmatprep.subr.mxu0 0.0
    %218 = vmatpush2.msra.mxu0 0.0
    %219 = vmatprep.subr.mxu0 0.0
    %220 = vmatpush2.msra.mxu0 0.0
    %221 = vmatprep.subr.mxu0 0.0
    %222 = vmatpush2.msra.mxu0 0.0
    %223 = vmatprep.subr.mxu0 0.0
    %224 = vmatpush2.msra.mxu0 0.0
    %225 = vmatprep.subr.mxu0 0.0
    %226 = vmatpush2.msra.mxu0 0.0
    %227 = vmatprep.subr.mxu0 0.0
    %228 = vmatpush2.msra.mxu0 0.0
    %229 = vmatprep.subr.mxu0 0.0
    %230 = vmatpush2.msra.mxu0 0.0
    %231 = vmatprep.subr.mxu0 0.0
    %232 = vmatpush2.msra.mxu0 0.0
    %233 = vmatprep.mubr.f32.mxu0 0.0
    %234 = vmatmul.mubr.f32.gmra.mxu0 %v167
    %v235 = vpop.f32.mrf.mxu0
    %v236 = vadd.f32 %v163, %v235
    %v237 = vpop.f32.mrf.mxu0
    %238 = vdwg.mxu0
    %v239 = vmax.f32 %v236, 0.0
    %v240 = vld [vmem:[%s5] sm:$0xff]
    %v241 = vld [vmem:[%s6] sm:$0x1]
    %v243 = vlaneseq
    %v244 = vshrl.u32 %v243, 7
    %v245 = vsub.s32 0, %v244
    %v246 = vrot.slane %v241, %v245
    %vm248 = vcmask 64512
    %v250 = vsel %vm248, %v239, 0
    %252 = vmatprep.subr.mxu0 0.0
    %253 = vmatpush1.msra.mxu0 0.0
    %254 = vmatprep.subr.mxu0 0.0
    %255 = vmatpush1.msra.mxu0 0.0
    %256 = vmatprep.subr.mxu0 0.0
    %257 = vmatpush1.msra.mxu0 0.0
    %258 = vmatprep.subr.mxu0 0.0
    %259 = vmatpush1.msra.mxu0 0.0
    %260 = vmatprep.subr.mxu0 0.0
    %261 = vmatpush1.msra.mxu0 0.0
    %262 = vmatprep.subr.mxu0 0.0
    %263 = vmatpush1.msra.mxu0 0.0
    %264 = vmatprep.subr.mxu0 0.0
    %265 = vmatpush1.msra.mxu0 0.0
    %266 = vmatprep.subr.mxu0 0.0
    %267 = vmatpush1.msra.mxu0 0.0
    %268 = vmatprep.subr.mxu0 0.0
    %269 = vmatpush1.msra.mxu0 0.0
    %270 = vmatprep.subr.mxu0 0.0
    %271 = vmatpush1.msra.mxu0 0.0
    %272 = vmatprep.subr.mxu0 0.0
    %273 = vmatpush1.msra.mxu0 0.0
    %274 = vmatprep.subr.mxu0 0.0
    %275 = vmatpush1.msra.mxu0 0.0
    %276 = vmatprep.subr.mxu0 0.0
    %277 = vmatpush1.msra.mxu0 0.0
    %278 = vmatprep.subr.mxu0 0.0
    %279 = vmatpush1.msra.mxu0 0.0
    %280 = vmatprep.subr.mxu0 0.0
    %281 = vmatpush1.msra.mxu0 0.0
    %282 = vmatprep.subr.mxu0 0.0
    %283 = vmatpush1.msra.mxu0 %v240
    %284 = vmatprep.subr.mxu0 0.0
    %285 = vmatpush2.msra.mxu0 0.0
    %286 = vmatprep.subr.mxu0 0.0
    %287 = vmatpush2.msra.mxu0 0.0
    %288 = vmatprep.subr.mxu0 0.0
    %289 = vmatpush2.msra.mxu0 0.0
    %290 = vmatprep.subr.mxu0 0.0
    %291 = vmatpush2.msra.mxu0 0.0
    %292 = vmatprep.subr.mxu0 0.0
    %293 = vmatpush2.msra.mxu0 0.0
    %294 = vmatprep.subr.mxu0 0.0
    %295 = vmatpush2.msra.mxu0 0.0
    %296 = vmatprep.subr.mxu0 0.0
    %297 = vmatpush2.msra.mxu0 0.0
    %298 = vmatprep.subr.mxu0 0.0
    %299 = vmatpush2.msra.mxu0 0.0
    %300 = vmatprep.subr.mxu0 0.0
    %301 = vmatpush2.msra.mxu0 0.0
    %302 = vmatprep.subr.mxu0 0.0
    %303 = vmatpush2.msra.mxu0 0.0
    %304 = vmatprep.subr.mxu0 0.0
    %305 = vmatpush2.msra.mxu0 0.0
    %306 = vmatprep.subr.mxu0 0.0
    %307 = vmatpush2.msra.mxu0 0.0
    %308 = vmatprep.subr.mxu0 0.0
    %309 = vmatpush2.msra.mxu0 0.0
    %310 = vmatprep.subr.mxu0 0.0
    %311 = vmatpush2.msra.mxu0 0.0
    %312 = vmatprep.subr.mxu0 0.0
    %313 = vmatpush2.msra.mxu0 0.0
    %314 = vmatprep.subr.mxu0 0.0
    %315 = vmatpush2.msra.mxu0 0.0
    %316 = vmatprep.mubr.f32.mxu0 0.0
    %317 = vmatmul.mubr.f32.gmra.mxu0 %v250
    %v318 = vpop.f32.mrf.mxu0
    %v319 = vadd.f32 %v246, %v318
    %v320 = vpop.f32.mrf.mxu0
    %321 = vdwg.mxu0
    %v322 = vmax.f32 %v319, 0.0
    %v323 = vld [vmem:[%s7] sm:$0xff]
    %v324 = vld [vmem:[%s7 + $0x8] sm:$0xff]
    %v325 = vld [vmem:[%s7 + $0x10] sm:$0xff]
    %v326 = vld [vmem:[%s7 + $0x18] sm:$0xff]
    %v327 = vld [vmem:[%s7 + $0x20] sm:$0xf]
    %v328 = vld [vmem:[%s8] sm:$0x1]
    %v330 = vlaneseq
    %v331 = vshrl.u32 %v330, 7
    %v332 = vsub.s32 0, %v331
    %v333 = vrot.slane %v328, %v332
    %v336 = vsel %vm74, %v327, 0
    %338 = vmatprep.subr.mxu0 0.0
    %339 = vmatpush1.msra.mxu0 0.0
    %340 = vmatprep.subr.mxu0 0.0
    %341 = vmatpush1.msra.mxu0 0.0
    %342 = vmatprep.subr.mxu0 0.0
    %343 = vmatpush1.msra.mxu0 0.0
    %344 = vmatprep.subr.mxu0 0.0
    %345 = vmatpush1.msra.mxu0 0.0
    %346 = vmatprep.subr.mxu0 0.0
    %347 = vmatpush1.msra.mxu0 0.0
    %348 = vmatprep.subr.mxu0 0.0
    %349 = vmatpush1.msra.mxu0 0.0
    %350 = vmatprep.subr.mxu0 0.0
    %351 = vmatpush1.msra.mxu0 0.0
    %352 = vmatprep.subr.mxu0 0.0
    %353 = vmatpush1.msra.mxu0 0.0
    %354 = vmatprep.subr.mxu0 0.0
    %355 = vmatpush1.msra.mxu0 0.0
    %356 = vmatprep.subr.mxu0 0.0
    %357 = vmatpush1.msra.mxu0 0.0
    %358 = vmatprep.subr.mxu0 0.0
    %359 = vmatpush1.msra.mxu0 0.0
    %360 = vmatprep.subr.mxu0 0.0
    %361 = vmatpush1.msra.mxu0 %v336
    %362 = vmatprep.subr.mxu0 0.0
    %363 = vmatpush1.msra.mxu0 %v326
    %364 = vmatprep.subr.mxu0 0.0
    %365 = vmatpush1.msra.mxu0 %v325
    %366 = vmatprep.subr.mxu0 0.0
    %367 = vmatpush1.msra.mxu0 %v324
    %368 = vmatprep.subr.mxu0 0.0
    %369 = vmatpush1.msra.mxu0 %v323
    %370 = vmatprep.subr.mxu0 0.0
    %371 = vmatpush2.msra.mxu0 0.0
    %372 = vmatprep.subr.mxu0 0.0
    %373 = vmatpush2.msra.mxu0 0.0
    %374 = vmatprep.subr.mxu0 0.0
    %375 = vmatpush2.msra.mxu0 0.0
    %376 = vmatprep.subr.mxu0 0.0
    %377 = vmatpush2.msra.mxu0 0.0
    %378 = vmatprep.subr.mxu0 0.0
    %379 = vmatpush2.msra.mxu0 0.0
    %380 = vmatprep.subr.mxu0 0.0
    %381 = vmatpush2.msra.mxu0 0.0
    %382 = vmatprep.subr.mxu0 0.0
    %383 = vmatpush2.msra.mxu0 0.0
    %384 = vmatprep.subr.mxu0 0.0
    %385 = vmatpush2.msra.mxu0 0.0
    %386 = vmatprep.subr.mxu0 0.0
    %387 = vmatpush2.msra.mxu0 0.0
    %388 = vmatprep.subr.mxu0 0.0
    %389 = vmatpush2.msra.mxu0 0.0
    %390 = vmatprep.subr.mxu0 0.0
    %391 = vmatpush2.msra.mxu0 0.0
    %392 = vmatprep.subr.mxu0 0.0
    %393 = vmatpush2.msra.mxu0 0.0
    %394 = vmatprep.subr.mxu0 0.0
    %395 = vmatpush2.msra.mxu0 0.0
    %396 = vmatprep.subr.mxu0 0.0
    %397 = vmatpush2.msra.mxu0 0.0
    %398 = vmatprep.subr.mxu0 0.0
    %399 = vmatpush2.msra.mxu0 0.0
    %400 = vmatprep.subr.mxu0 0.0
    %401 = vmatpush2.msra.mxu0 0.0
    %402 = vmatprep.mubr.f32.mxu0 0.0
    %403 = vmatmul.mubr.f32.gmra.mxu0 %v72
    %v404 = vpop.f32.mrf.mxu0
    %v405 = vadd.f32 %v333, %v404
    %v406 = vpop.f32.mrf.mxu0
    %407 = vdwg.mxu0
    %v408 = vadd.f32 %v405, %v322
    %vm409 = vcmask 582656
    %410 = vst.msk [vmem:[#allocation7] sm:$0x3] %vm409, %v408
    // Predicated region
    $region46: #{tpu_custom_call.1} parent=1 // pred_check
      _
    $region47: #{tpu_custom_call.1} parent=1 // pred_check_branch
      %412 = sbr.rel (0) target = $region49
    $region48: #{tpu_custom_call.1} parent=1 // pred_region
      %s414 = ssub.s32 32, 32
      %415 = vsyncadd [#allocation4], %s414
      %s417 = sshll.u32 [#allocation7], 4
      %s418 = int_to_ptr.vmem [resolvable:$true] %s417
      %420 = dma.vmem_to_hbm [thread:$0]  %s418, 32, %s9, [#allocation4]
    $region49: #{tpu_custom_call.1} parent=1 // pred_fallthru
      _
    // Predicated region
    $region50: #{tpu_custom_call.1} parent=1 // pred_check
      _
    $region51: #{tpu_custom_call.1} parent=1 // pred_check_branch
      %422 = sbr.rel (0) target = $region53
    $region52: #{tpu_custom_call.1} parent=1 // pred_region
      %423 = dma.done [#allocation4], 32
    $region53: #{tpu_custom_call.1} parent=1 // pred_fallthru
      _
    %424 = vsyncpa [#allocation3], 1
    %425 = vsyncpa [#allocation6], 1
    %426 = vsyncpa [#allocation4], 1

</llo_original>
